<compile_context>
chip_gen: v5e
topology: v5e:2x2
jax: 0.10.0
libtpu: 0.0.40
codegen_flags: <defaults>
</compile_context>

<pallas_src>
import jax
import jax.numpy as jnp
from jax.experimental import pallas as pl
from jax.experimental.pallas import tpu as pltpu


def _round_up(x, m):
    return ((x + m - 1) // m) * m


# ----------------------------------------------------------------------------
# Kernels
# ----------------------------------------------------------------------------
def _mlp_kernel_small(x_ref, w_ref, b_ref, o_ref):
    """Single-block fast path: o = tanh(x @ W + b)."""
    y = jnp.dot(x_ref[...].astype(w_ref.dtype), w_ref[...],
                preferred_element_type=jnp.float32)
    y = y + b_ref[...].astype(jnp.float32)
    o_ref[...] = jnp.tanh(y).astype(o_ref.dtype)


def _mlp_kernel_nok(x_ref, w_ref, b_ref, o_ref):
    """Tiled path, K not tiled (weight block constant / resident when grid_n==1).
    x_ref: (tm, K)  w_ref: (K, tn)  b_ref: (1, tn)  o_ref: (tm, tn)."""
    y = jnp.dot(x_ref[...].astype(w_ref.dtype), w_ref[...],
                preferred_element_type=jnp.float32)
    y = y + b_ref[...].astype(jnp.float32)
    o_ref[...] = jnp.tanh(y).astype(o_ref.dtype)


def _mlp_kernel_ktiled(x_ref, w_ref, b_ref, o_ref, acc_ref):
    """Fallback for very large in_dim: K is a reduction grid axis (innermost)."""
    k = pl.program_id(2)
    part = jnp.dot(x_ref[...].astype(w_ref.dtype), w_ref[...],
                   preferred_element_type=jnp.float32)

    @pl.when(k == 0)
    def _assign():                      # assign, not zero+accumulate
        acc_ref[...] = part

    @pl.when(k != 0)
    def _accum():
        acc_ref[...] += part

    @pl.when(k == pl.num_programs(2) - 1)
    def _epilogue():
        y = acc_ref[...] + b_ref[...].astype(jnp.float32)
        o_ref[...] = jnp.tanh(y).astype(o_ref.dtype)


# ----------------------------------------------------------------------------
# One-time parameter preparation (outside the per-call hot path)
# ----------------------------------------------------------------------------
def prepare_mlp_params(weight, bias, compute_dtype=jnp.bfloat16):
    """PyTorch-layout weight (out_dim, in_dim) -> pre-transposed (in_dim, N_pad)
    in the MXU compute dtype (bf16 by default), N padded to a lane-dense
    multiple of 128.  Bias stays f32 (epilogue math is always f32)."""
    out_dim, in_dim = weight.shape
    n_pad = _round_up(out_dim, 128)
    w_t = jnp.zeros((in_dim, n_pad), compute_dtype)
    w_t = w_t.at[:, :out_dim].set(weight.T.astype(compute_dtype))
    b2d = jnp.zeros((1, n_pad), jnp.float32).at[0, :out_dim].set(
        bias.astype(jnp.float32))
    return w_t, b2d, out_dim


# ----------------------------------------------------------------------------
# Wrapper
# ----------------------------------------------------------------------------
_FAST_PATH_BYTES = 2 << 20  # single-block path when the whole problem is tiny


def mlp_layer(features, w_t, b2d, out_dim, *,
              tm_max=1024, tn_max=512, tk_max=512):
    """features: [..., in_dim]; w_t: (in_dim, N_pad) pre-transposed compute-dtype
    weight; b2d: (1, N_pad) f32 bias.  Returns tanh(features @ W^T + b)."""
    in_dim = features.shape[-1]
    k_w, n_pad = w_t.shape
    assert k_w == in_dim, "weight was prepared for a different in_dim"
    lead = features.shape[:-1]
    x2d = features.reshape(-1, in_dim)
    m = x2d.shape[0]
    out_dtype = features.dtype
    x_bytes = jnp.dtype(out_dtype).itemsize
    w_bytes = jnp.dtype(w_t.dtype).itemsize
    o_bytes = jnp.dtype(out_dtype).itemsize

    # ---- VMEM budget: v7x-safe defaults, raised on 128 MiB parts ----
    vmem_budget = 36 << 20
    vmem_cap = 56 << 20
    try:
        if pltpu.get_tpu_info().vmem_capacity_bytes >= (100 << 20):
            vmem_budget = 80 << 20     # v5e / v6e: 128 MiB physical
            vmem_cap = 100 << 20
    except Exception:
        pass

    # ---- Fast path: one full-array block, no grid, no scratch, no padding ----
    small_bytes = (m * in_dim * x_bytes + in_dim * n_pad * w_bytes
                   + 2 * m * n_pad * 4 + n_pad * 4)
    if small_bytes <= _FAST_PATH_BYTES:
        out = pl.pallas_call(
            _mlp_kernel_small,
            out_shape=jax.ShapeDtypeStruct((m, n_pad), out_dtype),
        )(x2d, w_t, b2d)
        return out[:, :out_dim].reshape(*lead, out_dim)

    # ---- Tile selection -------------------------------------------------
    # Keep the whole weight resident in VMEM when it fits: no N/K tiling ->
    # constant weight block index -> fetched from HBM exactly once.
    w_full = in_dim * n_pad * w_bytes
    if 2 * w_full <= vmem_budget // 2:
        tn, tk = n_pad, in_dim
    else:
        tn = min(tn_max, n_pad)                               # multiple of 128
        tk = in_dim if 2 * in_dim * tn * w_bytes <= vmem_budget // 2 \
            else min(tk_max, in_dim)
    k_tiled = tk < in_dim

    def _vmem_est(tm_):
        est = (2 * tm_ * tk * x_bytes        # x tile, double-buffered
               + 2 * tk * tn * w_bytes       # w tile, double-buffered
               + 2 * tm_ * tn * o_bytes      # out tile, double-buffered
               + 2 * tn * 4)                 # bias
        if k_tiled:
            est += tm_ * tn * 4              # f32 accumulator scratch
        return est

    tm = min(tm_max, _round_up(m, 16))       # multiple of 16 (bf16 sublanes)
    while _vmem_est(tm) > vmem_budget and tm > 64:
        tm = _round_up(tm // 2, 16)
    # v7x: keep >= 2 M tiles so the "parallel" axis shards across both TCs.
    while pl.cdiv(m, tm) < 2 and tm > 256:
        tm = _round_up(tm // 2, 16)

    # Zero-pad K only when K is actually tiled (padded K contributes 0).
    if k_tiled:
        k_full = _round_up(in_dim, tk)
        if k_full != in_dim:
            x2d = jnp.pad(x2d, ((0, 0), (0, k_full - in_dim)))
            w_t = jnp.pad(w_t, ((0, k_full - in_dim), (0, 0)))
    else:
        k_full = in_dim

    grid_m = pl.cdiv(m, tm)
    grid_n = pl.cdiv(n_pad, tn)
    grid_k = k_full // tk if k_tiled else 1

    if k_tiled:
        kernel = _mlp_kernel_ktiled
        grid = (grid_m, grid_n, grid_k)
        in_specs = [
            pl.BlockSpec((tm, tk), lambda i, j, k: (i, k)),
            pl.BlockSpec((tk, tn), lambda i, j, k: (k, j)),
            pl.BlockSpec((1, tn), lambda i, j, k: (0, j)),
        ]
        out_specs = pl.BlockSpec((tm, tn), lambda i, j, k: (i, j))
        scratch = [pltpu.VMEM((tm, tn), jnp.float32)]
        semantics = ("parallel", "parallel", "arbitrary")
    else:
        kernel = _mlp_kernel_nok
        grid = (grid_m, grid_n)
        in_specs = [
            pl.BlockSpec((tm, in_dim), lambda i, j: (i, 0)),
            pl.BlockSpec((in_dim, tn), lambda i, j: (0, j)),
            pl.BlockSpec((1, tn), lambda i, j: (0, j)),
        ]
        out_specs = pl.BlockSpec((tm, tn), lambda i, j: (i, j))
        scratch = []
        semantics = ("parallel", "parallel")

    resident_w = (not k_tiled) and grid_n == 1
    bytes_accessed = int(
        m * k_full * x_bytes * grid_n                              # x reads
        + k_full * n_pad * w_bytes * (1 if resident_w else grid_m)  # w reads
        + m * n_pad * o_bytes                                       # out writes
        + n_pad * 4)                                                # bias

    out = pl.pallas_call(
        kernel,
        out_shape=jax.ShapeDtypeStruct((m, n_pad), out_dtype),
        grid=grid,
        in_specs=in_specs,
        out_specs=out_specs,
        scratch_shapes=scratch,
        compiler_params=pltpu.CompilerParams(
            dimension_semantics=semantics,
            vmem_limit_bytes=int(min(max(2 * _vmem_est(tm), 16 << 20),
                                     vmem_cap)),
        ),
        cost_estimate=pl.CostEstimate(
            flops=2 * m * k_full * n_pad,
            transcendentals=m * n_pad,
            bytes_accessed=bytes_accessed,
        ),
    )(x2d, w_t, b2d)

    return out[:, :out_dim].reshape(*lead, out_dim)


# ----------------------------------------------------------------------------
# Deterministic init mimicking nn.Linear: U(-1/sqrt(in_dim), 1/sqrt(in_dim))
# ----------------------------------------------------------------------------
def init_linear_params(key, in_dim, out_dim, dtype=jnp.float32):
    kw, kb = jax.random.split(key)
    bound = 1.0 / jnp.sqrt(jnp.array(in_dim, dtype))
    weight = jax.random.uniform(kw, (out_dim, in_dim), dtype,
                                minval=-bound, maxval=bound)
    bias = jax.random.uniform(kb, (out_dim,), dtype,
                              minval=-bound, maxval=bound)
    return weight, bias


if __name__ == "__main__":
    key = jax.random.PRNGKey(0)
    k1, k2, k3, k4 = jax.random.split(key, 4)

    # Case 1: shipped MLPLayer config (use_con=False, hidden_size=32),
    # batch=2, seq=8.  Exercises the single-block fast path.
    batch, seq, hidden = 2, 8, 32
    feats = jax.random.normal(k1, (batch, seq, hidden), jnp.float32)
    w, b = init_linear_params(k2, hidden, hidden)
    w_t, b2d, out_dim = prepare_mlp_params(w, b)
    out = jax.block_until_ready(mlp_layer(feats, w_t, b2d, out_dim))
    ref = jnp.tanh(feats @ w.T + b)
    assert out.shape == ref.shape
    assert jnp.allclose(out, ref, atol=2e-2, rtol=0), "case 1 mismatch"

    # Case 2: larger config (use_con=True, hidden_size=256) to exercise the
    # tiled path: bf16 matmul, resident weight, 2 parallel M tiles.
    b2_, s2_, h2_ = 4, 256, 256
    feats2 = jax.random.normal(k3, (b2_, s2_, 2 * h2_), jnp.float32)
    w2, bb2 = init_linear_params(k4, 2 * h2_, h2_)
    w2_t, b2d2, out_dim2 = prepare_mlp_params(w2, bb2)
    out2 = jax.block_until_ready(mlp_layer(feats2, w2_t, b2d2, out_dim2))
    ref2 = jnp.tanh(feats2 @ w2.T + bb2)
    assert out2.shape == ref2.shape
    assert jnp.allclose(out2, ref2, atol=3e-2, rtol=0), "case 2 mismatch"

    print("KERNEL_OK")
</pallas_src>

<mosaic_0001>
module attributes {stable_mosaic.version = 11 : i64} {
  func.func @_mlp_kernel_small(%arg0: memref<16x32xf32, #tpu.memory_space<vmem>>, %arg1: memref<32x128xbf16, #tpu.memory_space<vmem>>, %arg2: memref<1x128xf32, #tpu.memory_space<vmem>>, %arg3: memref<16x128xf32, #tpu.memory_space<vmem>>) attributes {dimension_semantics = [], scalar_prefetch = 0 : i64, scratch_operands = 0 : i64, tpu.core_type = #tpu.core_type<tc>} {
    %c0 = arith.constant 0 : index
    %c0_0 = arith.constant 0 : index
    %0 = vector.load %arg0[%c0, %c0_0] : memref<16x32xf32, #tpu.memory_space<vmem>>, vector<16x32xf32>
    %1 = arith.truncf %0 : vector<16x32xf32> to vector<16x32xbf16>
    %c0_1 = arith.constant 0 : index
    %c0_2 = arith.constant 0 : index
    %2 = vector.load %arg1[%c0_1, %c0_2] : memref<32x128xbf16, #tpu.memory_space<vmem>>, vector<32x128xbf16>
    %cst = arith.constant dense<0.000000e+00> : vector<16x128xf32>
    %3 = tpu.matmul %1, %2, %cst {dimension_numbers = #tpu.dot_dimension_numbers<[1], [0], [0], [1], [0, 0, 1, 1], [], []>} : vector<16x32xbf16>, vector<32x128xbf16>, vector<16x128xf32> -> vector<16x128xf32>
    %c0_3 = arith.constant 0 : index
    %c0_4 = arith.constant 0 : index
    %4 = vector.load %arg2[%c0_3, %c0_4] : memref<1x128xf32, #tpu.memory_space<vmem>>, vector<1x128xf32>
    %5 = vector.broadcast %4 : vector<1x128xf32> to vector<16x128xf32>
    %6 = arith.addf %3, %5 : vector<16x128xf32>
    %7 = math.tanh %6 : vector<16x128xf32>
    %c0_5 = arith.constant 0 : index
    %c0_6 = arith.constant 0 : index
    %8 = vector.load %arg3[%c0_5, %c0_6] : memref<16x128xf32, #tpu.memory_space<vmem>>, vector<16x128xf32>
    tpu.vector_store %arg3[%c0_5, %c0_6], %7 {strides = array<i32>} : memref<16x128xf32, #tpu.memory_space<vmem>>, vector<16x128xf32>,
    return
  }
}

</mosaic_0001>

<llo_original>
// kernel: tpu_custom_call.1
$region0: #{tpu_custom_call.1}
  #allocation0 [shape = 'u32[]', space=smem, size = 0x4, offset = 0x4, fixed_abs, tag = 'smem constant byte address 0x4 - core index']
  #allocation1 [shape = 'u32[72,128]{1,0:T(1,128)}', space=vmem, size = 0x9000, scoped, tag = 'internal scratch']
  %s0 = inlined_call_operand.hbm [shape: f32[16,32], index: 0, kind: input, shape index: {}]
  %s1 = inlined_call_operand.hbm [shape: bf16[32,128], index: 1, kind: input, shape index: {}]
  %s2 = inlined_call_operand.vmem [shape: f32[1,128], index: 2, kind: input, shape index: {}]
  %s3 = inlined_call_operand.hbm [shape: f32[16,128], index: 3, kind: output, shape index: {}]
  %s4 = sld [smem:[#allocation0]]
  $region30: #{tpu_custom_call.1} parent=0
    _
  %s6 = ssub.s32 1, %s4
  %s7 = scalar_select 0, %s6, %s4
  $region1: #{tpu_custom_call.1} parent=0
    #allocation2 [shape = 'u8[8192]{0}', space=vmem, size = 0x2000, scoped, tag = 'input window, operand 0, single buffered']
    #allocation3 [shape = 's32[1]{0}', space=sflag, size = 0x4, scoped, tag = 'scoped memory for tpu_custom_call.1']
    #allocation4 [shape = 's32[1]{0}', space=sflag, size = 0x4, scoped, tag = 'scoped memory for tpu_custom_call.1']
    #allocation5 [shape = 'u8[8192]{0}', space=vmem, size = 0x2000, scoped, tag = 'input window, operand 1, single buffered']
    #allocation6 [shape = 's32[1]{0}', space=sflag, size = 0x4, scoped, tag = 'scoped memory for tpu_custom_call.1']
    #allocation7 [shape = 'u8[8192]{0}', space=vmem, size = 0x2000, scoped, tag = 'output window, operand 0, single buffered']
    %8 = vsyncpa [#allocation3], 0
    %9 = vsyncpa [#allocation6], 0
    %10 = vsyncpa [#allocation4], 0
    // Predicated region
    $region2: #{tpu_custom_call.1} parent=1 // pred_check
      _
    $region3: #{tpu_custom_call.1} parent=1 // pred_check_branch
      %12 = sbr.rel (0) target = $region5
    $region4: #{tpu_custom_call.1} parent=1 // pred_region
      %14 = vsyncadd [#allocation3], 0
      %s15 = sshll.u32 %s0, 4
      %s16 = int_to_ptr.hbm [resolvable:$true] %s15
      %s17 = sshll.u32 [#allocation2], 4
      %s18 = int_to_ptr.vmem [resolvable:$true] %s17
      %23 = dma.hbm_to_vmem [thread:$0]  %s16, 256, %s18, [#allocation3], 128, 128, 8
    $region5: #{tpu_custom_call.1} parent=1 // pred_fallthru
      _
    // Predicated region
    $region6: #{tpu_custom_call.1} parent=1 // pred_check
      _
    $region7: #{tpu_custom_call.1} parent=1 // pred_check_branch
      %25 = sbr.rel (0) target = $region9
    $region8: #{tpu_custom_call.1} parent=1 // pred_region
      %27 = vsyncadd [#allocation6], 0
      %s28 = sshll.u32 %s1, 4
      %s29 = int_to_ptr.hbm [resolvable:$true] %s28
      %s30 = sshll.u32 [#allocation5], 4
      %s31 = int_to_ptr.vmem [resolvable:$true] %s30
      %36 = dma.hbm_to_vmem [thread:$0]  %s29, 256, %s31, [#allocation6], 64, 64, 4
    $region9: #{tpu_custom_call.1} parent=1 // pred_fallthru
      _
    // Predicated region
    $region10: #{tpu_custom_call.1} parent=1 // pred_check
      _
    $region11: #{tpu_custom_call.1} parent=1 // pred_check_branch
      %38 = sbr.rel (0) target = $region13
    $region12: #{tpu_custom_call.1} parent=1 // pred_region
      _
    $region13: #{tpu_custom_call.1} parent=1 // pred_fallthru
      _
    // Predicated region
    $region14: #{tpu_custom_call.1} parent=1 // pred_check
      _
    $region15: #{tpu_custom_call.1} parent=1 // pred_check_branch
      %40 = sbr.rel (0) target = $region17
    $region16: #{tpu_custom_call.1} parent=1 // pred_region
      %42 = dma.done [#allocation3], 256
    $region17: #{tpu_custom_call.1} parent=1 // pred_fallthru
      _
    // Predicated region
    $region18: #{tpu_custom_call.1} parent=1 // pred_check
      _
    $region19: #{tpu_custom_call.1} parent=1 // pred_check_branch
      %44 = sbr.rel (0) target = $region21
    $region20: #{tpu_custom_call.1} parent=1 // pred_region
      %46 = dma.done [#allocation6], 256
    $region21: #{tpu_custom_call.1} parent=1 // pred_fallthru
      _
    %v48 = vld [vmem:[#allocation2] sm:$0xff]
    %v49 = vld [vmem:[#allocation2 + $0x8] sm:$0xff]
    %v50 = vpack.c.bf16 %v49, %v48
    %v51 = vld [vmem:[#allocation5] sm:$0xf]
    %v52 = vld [vmem:[#allocation5 + $0x4] sm:$0xf]
    %v53 = vld [vmem:[#allocation5 + $0x8] sm:$0xf]
    %v54 = vld [vmem:[#allocation5 + $0xc] sm:$0xf]
    %v55 = vld [vmem:[%s2] sm:$0x1]
    %v57 = vperm.slane %v55, 0
    %v63 = vunpack.c.l.b16 %v51
    %v64 = vunpack.c.l.b16 %v52
    %v65 = vunpack.c.l.b16 %v53
    %v66 = vunpack.c.l.b16 %v54
    %v67 = vpack.c.b16 %v64, %v63
    %v68 = vpack.c.b16 %v66, %v65
    %vm71 = vcmask 261120
    %v73 = vsel %vm71, %v50, 0
    %75 = vmatpush.bf16.msra.mxu0 0
    %76 = vmatpush.bf16.msra.mxu0 0
    %77 = vmatpush.bf16.msra.mxu0 0
    %78 = vmatpush.bf16.msra.mxu0 0
    %79 = vmatpush.bf16.msra.mxu0 0
    %80 = vmatpush.bf16.msra.mxu0 0
    %81 = vmatpush.bf16.msra.mxu0 %v68
    %82 = vmatpush.bf16.msra.mxu0 %v67
    %83 = vmatmul.bf16.gmra.mxu0 %v73
    %v84 = vpop.f32.mrf.mxu0
    %v85 = vadd.f32 %v57, %v84
    %v86 = vpop.f32.mrf.mxu0
    %v87 = vadd.f32 %v57, %v86
    %88 = vdwg.mxu0
    %v89 = vtanh.pop %v85
    %v90 = vtanh.pop %v87
    %91 = vst [vmem:[#allocation7] sm:$0xff] %v89
    %92 = vst [vmem:[#allocation7 + $0x8] sm:$0xff] %v90
    // Predicated region
    $region22: #{tpu_custom_call.1} parent=1 // pred_check
      _
    $region23: #{tpu_custom_call.1} parent=1 // pred_check_branch
      %94 = sbr.rel (0) target = $region25
    $region24: #{tpu_custom_call.1} parent=1 // pred_region
      %96 = vsyncadd [#allocation4], 0
      %s97 = sshll.u32 [#allocation7], 4
      %s98 = int_to_ptr.vmem [resolvable:$true] %s97
      %s99 = sshll.u32 %s3, 4
      %s100 = int_to_ptr.hbm [resolvable:$true] %s99
      %105 = dma.vmem_to_hbm [thread:$0]  %s98, 256, %s100, [#allocation4], 128, 128, 8
    $region25: #{tpu_custom_call.1} parent=1 // pred_fallthru
      _
    // Predicated region
    $region26: #{tpu_custom_call.1} parent=1 // pred_check
      _
    $region27: #{tpu_custom_call.1} parent=1 // pred_check_branch
      %107 = sbr.rel (0) target = $region29
    $region28: #{tpu_custom_call.1} parent=1 // pred_region
      %109 = dma.done [#allocation4], 256
    $region29: #{tpu_custom_call.1} parent=1 // pred_fallthru
      _
    %110 = vsyncpa [#allocation3], 1
    %111 = vsyncpa [#allocation6], 1
    %112 = vsyncpa [#allocation4], 1

</llo_original>
